<compile_context>
chip_gen: v5e
topology: v5e:2x2
jax: 0.10.0
libtpu: 0.0.40
codegen_flags: <defaults>
</compile_context>

<pallas_src>
import functools

import jax
import jax.numpy as jnp
from jax.experimental import pallas as pl
from jax.experimental.pallas import tpu as pltpu

_LANE = 128
_SUB = 8
_MAX_BLOCK_ROWS = 2048   # 2048 * 128 * 4 B = 1 MiB per stream per buffer
_N_SPLITS = 2            # leading "parallel" axis -> 2 TensorCores on v7x


def _round_up(x, m):
    return (x + m - 1) // m * m


def _mag_mse_kernel(coef_ref, sr_mag_ref, hr_mag_ref, out_ref, *, scale):
    """Per split s (grid axis 0, parallel): accumulate sum((|sr_fft|-|hr_fft|)^2)
    over the reduction axis (grid axis 1, arbitrary) into a lane-dense (8,128)
    resident output block; apply coef * 255^2 / N once at the last step."""
    i = pl.program_id(1)

    @pl.when(i == 0)
    def _init():
        out_ref[...] = jnp.zeros_like(out_ref)

    d = sr_mag_ref[...] - hr_mag_ref[...]
    # Leading-axis reduce of the (rows/8, 8, 128) view = plain VPU adds; the
    # cross-lane/cross-sublane reduction is deferred to the wrapper (a single
    # tiny (2, 8, 128) sum).
    out_ref[...] += jnp.sum((d * d).reshape(-1, _SUB, _LANE),
                            axis=0, keepdims=True)

    @pl.when(i == pl.num_programs(1) - 1)
    def _finalize():
        out_ref[...] = out_ref[...] * (coef_ref[0] * scale)


def _fftx255_loss_impl(sr, hr, coef):
    """coef * mse(|rfft2(255*sr, ortho)|, |rfft2(255*hr, ortho)|)."""
    assert sr.shape == hr.shape
    # rfft2 is linear: rfft2(255*x) == 255*rfft2(x); the x255 (and the 1/N of
    # the mean) are folded into one scalar applied inside the kernel.
    sr_fft = jnp.fft.rfft2(sr.astype(jnp.float32), norm="ortho")
    hr_fft = jnp.fft.rfft2(hr.astype(jnp.float32), norm="ortho")

    n_total = sr_fft.size                               # static Python int
    rows_needed = pl.cdiv(n_total, _LANE)
    block_rows = min(_MAX_BLOCK_ROWS, _round_up(rows_needed, _SUB))
    blocks_per_split = pl.cdiv(rows_needed, _N_SPLITS * block_rows)
    rows_padded = _N_SPLITS * blocks_per_split * block_rows
    pad = rows_padded * _LANE - n_total

    def prep(x_complex):
        # |x| must read the complex array anyway; abs + zero-pad + reshape all
        # fuse into one XLA fusion under jit -> a single f32 stream per input
        # for the Pallas kernel (half the bytes of separate real/imag streams).
        mag = jnp.abs(x_complex).reshape(-1)
        if pad:
            mag = jnp.pad(mag, (0, pad))
        return mag.reshape(rows_padded, _LANE)

    streams = (prep(sr_fft), prep(hr_fft))

    coef_arr = jnp.asarray(coef, dtype=jnp.float32).reshape(1)
    scale = (255.0 * 255.0) / float(n_total)

    def in_map(s, i, coef_ref):
        return (s * blocks_per_split + i, 0)

    data_spec = pl.BlockSpec((block_rows, _LANE), in_map)

    partials = pl.pallas_call(
        functools.partial(_mag_mse_kernel, scale=scale),
        out_shape=jax.ShapeDtypeStruct((_N_SPLITS, _SUB, _LANE), jnp.float32),
        grid_spec=pltpu.PrefetchScalarGridSpec(
            num_scalar_prefetch=1,
            grid=(_N_SPLITS, blocks_per_split),
            in_specs=[data_spec, data_spec],
            out_specs=pl.BlockSpec((1, _SUB, _LANE),
                                   lambda s, i, coef_ref: (s, 0, 0)),
        ),
        compiler_params=pltpu.CompilerParams(
            dimension_semantics=("parallel", "arbitrary"),
        ),
    )(coef_arr, *streams)

    # Final tiny reduction over the per-core, lane-dense partials (2*8*128).
    return jnp.sum(partials)


fftx255_loss = jax.jit(_fftx255_loss_impl)


if __name__ == "__main__":
    key = jax.random.PRNGKey(0)
    k_sr, k_hr = jax.random.split(key)

    # Small SR-style inputs: batch=2, channels=4, 16x16 spatial (NCHW like PyTorch)
    sr = jax.random.uniform(k_sr, (2, 4, 16, 16), dtype=jnp.float32)
    hr = jax.random.uniform(k_hr, (2, 4, 16, 16), dtype=jnp.float32)
    coef = 0.5

    loss = fftx255_loss(sr, hr, coef)
    jax.block_until_ready(loss)

    # Reference in plain JAX, written exactly like the PyTorch module.
    sr_f = jnp.fft.rfft2(sr * 255.0, norm="ortho")
    hr_f = jnp.fft.rfft2(hr * 255.0, norm="ortho")
    ref = coef * jnp.mean((jnp.abs(sr_f) - jnp.abs(hr_f)) ** 2)
    assert jnp.allclose(loss, ref, rtol=5e-4, atol=1e-2), (loss, ref)

    print("KERNEL_OK")
</pallas_src>

<mosaic_0001>
module attributes {stable_mosaic.version = 11 : i64} {
  func.func @_mag_mse_kernel(%arg0: i32, %arg1: i32, %arg2: memref<1xf32, #tpu.memory_space<smem>>, %arg3: memref<16x128xf32, #tpu.memory_space<vmem>>, %arg4: memref<16x128xf32, #tpu.memory_space<vmem>>, %arg5: memref<1x8x128xf32, #tpu.memory_space<vmem>>) attributes {dimension_semantics = [#tpu.dimension_semantics<parallel>, #tpu.dimension_semantics<arbitrary>], iteration_bounds = array<i64: 2, 1>, scalar_prefetch = 1 : i64, scratch_operands = 0 : i64, tpu.core_type = #tpu.core_type<tc>, window_params = [{transform_indices = @transform_0, window_bounds = array<i64: 16, 128>}, {transform_indices = @transform_1, window_bounds = array<i64: 16, 128>}, {transform_indices = @transform_2, window_bounds = array<i64: 1, 8, 128>}]} {
    %c0_i32 = arith.constant 0 : i32
    %0 = arith.cmpi eq, %arg1, %c0_i32 : i32
    %1 = arith.extui %0 : i1 to i32
    %c0_i32_0 = arith.constant 0 : i32
    %2 = arith.cmpi ne, %1, %c0_i32_0 : i32
    scf.if %2 {
      %cst_12 = arith.constant 0.000000e+00 : f32
      %16 = vector.broadcast %cst_12 : f32 to vector<1x8x128xf32>
      %c0_13 = arith.constant 0 : index
      %c0_14 = arith.constant 0 : index
      %c0_15 = arith.constant 0 : index
      %17 = vector.load %arg5[%c0_13, %c0_14, %c0_15] : memref<1x8x128xf32, #tpu.memory_space<vmem>>, vector<1x8x128xf32>
      tpu.vector_store %arg5[%c0_13, %c0_14, %c0_15], %16 {strides = array<i32>} : memref<1x8x128xf32, #tpu.memory_space<vmem>>, vector<1x8x128xf32>,
    } else {
    }
    %c0 = arith.constant 0 : index
    %c0_1 = arith.constant 0 : index
    %3 = vector.load %arg3[%c0, %c0_1] : memref<16x128xf32, #tpu.memory_space<vmem>>, vector<16x128xf32>
    %c0_2 = arith.constant 0 : index
    %c0_3 = arith.constant 0 : index
    %4 = vector.load %arg4[%c0_2, %c0_3] : memref<16x128xf32, #tpu.memory_space<vmem>>, vector<16x128xf32>
    %5 = arith.subf %3, %4 : vector<16x128xf32>
    %c0_4 = arith.constant 0 : index
    %c0_5 = arith.constant 0 : index
    %c0_6 = arith.constant 0 : index
    %6 = vector.load %arg5[%c0_4, %c0_5, %c0_6] : memref<1x8x128xf32, #tpu.memory_space<vmem>>, vector<1x8x128xf32>
    %7 = arith.mulf %5, %5 : vector<16x128xf32>
    %8 = vector.shape_cast %7 : vector<16x128xf32> to vector<2x8x128xf32>
    %cst = arith.constant dense<0.000000e+00> : vector<8x128xf32>
    %9 = vector.multi_reduction <add>, %8, %cst [0] : vector<2x8x128xf32> to vector<8x128xf32>
    %10 = vector.shape_cast %9 : vector<8x128xf32> to vector<1x8x128xf32>
    %11 = arith.addf %6, %10 : vector<1x8x128xf32>
    %c0_7 = arith.constant 0 : index
    %c0_8 = arith.constant 0 : index
    %c0_9 = arith.constant 0 : index
    %12 = vector.load %arg5[%c0_7, %c0_8, %c0_9] : memref<1x8x128xf32, #tpu.memory_space<vmem>>, vector<1x8x128xf32>
    tpu.vector_store %arg5[%c0_7, %c0_8, %c0_9], %11 {strides = array<i32>} : memref<1x8x128xf32, #tpu.memory_space<vmem>>, vector<1x8x128xf32>,
    %c0_i32_10 = arith.constant 0 : i32
    %13 = arith.cmpi eq, %arg1, %c0_i32_10 : i32
    %14 = arith.extui %13 : i1 to i32
    %c0_i32_11 = arith.constant 0 : i32
    %15 = arith.cmpi ne, %14, %c0_i32_11 : i32
    scf.if %15 {
      %c0_12 = arith.constant 0 : index
      %c0_13 = arith.constant 0 : index
      %c0_14 = arith.constant 0 : index
      %16 = vector.load %arg5[%c0_12, %c0_13, %c0_14] : memref<1x8x128xf32, #tpu.memory_space<vmem>>, vector<1x8x128xf32>
      %c0_15 = arith.constant 0 : index
      %17 = memref.load %arg2[%c0_15] : memref<1xf32, #tpu.memory_space<smem>>
      %cst_16 = arith.constant 56.4453125 : f32
      %18 = arith.mulf %17, %cst_16 : f32
      %19 = vector.broadcast %18 : f32 to vector<1x8x128xf32>
      %20 = arith.mulf %16, %19 : vector<1x8x128xf32>
      %c0_17 = arith.constant 0 : index
      %c0_18 = arith.constant 0 : index
      %c0_19 = arith.constant 0 : index
      %21 = vector.load %arg5[%c0_17, %c0_18, %c0_19] : memref<1x8x128xf32, #tpu.memory_space<vmem>>, vector<1x8x128xf32>
      tpu.vector_store %arg5[%c0_17, %c0_18, %c0_19], %20 {strides = array<i32>} : memref<1x8x128xf32, #tpu.memory_space<vmem>>, vector<1x8x128xf32>,
    } else {
    }
    return
  }
  func.func @transform_0(%arg0: i32, %arg1: i32, %arg2: memref<1xf32, #tpu.memory_space<smem>>) -> (i32, i32) {
    %c1_i32 = arith.constant 1 : i32
    %0 = arith.muli %arg0, %c1_i32 : i32
    %1 = arith.addi %0, %arg1 : i32
    %c0_i32 = arith.constant 0 : i32
    %c0_i32_0 = arith.constant 0 : i32
    return %1, %c0_i32 : i32, i32
  }
  func.func @transform_1(%arg0: i32, %arg1: i32, %arg2: memref<1xf32, #tpu.memory_space<smem>>) -> (i32, i32) {
    %c1_i32 = arith.constant 1 : i32
    %0 = arith.muli %arg0, %c1_i32 : i32
    %1 = arith.addi %0, %arg1 : i32
    %c0_i32 = arith.constant 0 : i32
    %c0_i32_0 = arith.constant 0 : i32
    return %1, %c0_i32 : i32, i32
  }
  func.func @transform_2(%arg0: i32, %arg1: i32, %arg2: memref<1xf32, #tpu.memory_space<smem>>) -> (i32, i32, i32) {
    %c0_i32 = arith.constant 0 : i32
    %c0_i32_0 = arith.constant 0 : i32
    %c0_i32_1 = arith.constant 0 : i32
    return %arg0, %c0_i32, %c0_i32_0 : i32, i32, i32
  }
}

</mosaic_0001>

<llo_original>
// kernel: _fftx255_loss_impl.1
$region0: #{_fftx255_loss_impl.1}
  #allocation0 [shape = 'u32[]', space=smem, size = 0x4, offset = 0x4, fixed_abs, tag = 'smem constant byte address 0x4 - core index']
  #allocation1 [shape = 'u32[72,128]{1,0:T(1,128)}', space=vmem, size = 0x9000, scoped, tag = 'internal scratch']
  #allocation2 [shape = 's32[1]{0}', space=sflag, size = 0x4, scoped, tag = 'scoped memory for _fftx255_loss_impl.1']
  #allocation3 [shape = 'f32[1]{0:T(128)S(6)}', space=smem, size = 0x200, scoped, tag = 'prefetched SMEM operand 0']
  %s0 = inlined_call_operand.<no memory space> [shape: f32[1], index: 0, kind: input, shape index: {}]
  %s1 = inlined_call_operand.vmem [shape: f32[32,128], index: 1, kind: input, shape index: {}]
  %s2 = inlined_call_operand.vmem [shape: f32[32,128], index: 2, kind: input, shape index: {}]
  %s3 = inlined_call_operand.vmem [shape: f32[2,8,128], index: 3, kind: output, shape index: {}]
  %s4 = sld [smem:[#allocation0]]
  $region49: #{_fftx255_loss_impl.1} parent=0
    _
  %s6 = ssub.s32 1, %s4
  %s7 = scalar_select 0, %s6, %s4
  %8 = sst [smem:[#allocation3]] %s0
  loop: start=0, step=1, limit=4
  $region2: #{_fftx255_loss_impl.1} parent=0 // loop_pre_header
    _
  $region3: #{_fftx255_loss_impl.1} parent=0 // loop_header
    %s10 = sphi 0, %s14
    %p11 = scmp.ge.s32.totalorder %s10, 4
    %s17 = sphi 0, %s29
    %s18 = sphi 0, %s25
    %s19 = sphi 0, %s17
    %s20 = sphi 0, %s18
    %s21 = sphi 0, %s19
    %s22 = sphi 0, %s20
    %s34 = sphi 0, %s36
    %s37 = sphi 0, %s34
    %s38 = sphi 0, %s37
    %s54 = sphi 0, %s38
    %s62 = sphi 0, %s64
    %s65 = sphi 0, %s62
    %s66 = sphi 0, %s65
    %s82 = sphi 0, %s66
    %s88 = sphi 0, %s90
    %s91 = sphi 0, %s88
    %s92 = sphi 0, %s91
    %s108 = sphi 0, %s92
  $region4: #{_fftx255_loss_impl.1} parent=0 // loop_header_branch
    %13 = sbr.rel (%p11) target = $region8
  $region5: #{_fftx255_loss_impl.1} parent=0 // loop_body
    %s15 = ssub.s32 %s10, 1
    %s16 = ssub.s32 %s10, 2
    %s23 = sadd.s32 1, %s18
    %p24 = scmp.ge.s32.totalorder %s23, 1
    %s25 = scalar_select %p24, 0, %s23
    %s26 = sadd.s32 1, %s17
    %s27 = scalar_select %p24, %s26, %s17
    %p28 = scmp.ge.s32.totalorder %s27, 2
    %s29 = scalar_select %p28, 0, %s27
    %s30 = sadd.s32 %s17, %s18
    %s31 = sadd.s32 %s29, %s25
    %s32 = ssub.s32 %s30, %s31
    %p33 = scmp.eq.s32.totalorder %s32, 0
    %s35 = sadd.s32 %s34, 1
    %s36 = scalar_select %p33, %s34, %s35
    %p39 = pneg %p33
    %p40 = scmp.eq.s32.totalorder %s10, 1
    %p41 = por %p39, %p40
    %p42 = scmp.ne.s32.totalorder %s34, %s37
    %p43 = scmp.eq.s32.totalorder %s10, 0
    %p44 = por %p42, %p43
    %p45 = scmp.ne.s32.totalorder %s34, %s37
    %p46 = scmp.eq.s32.totalorder %s15, 1
    %p47 = por %p45, %p46
    %p48 = scmp.ne.s32.totalorder %s37, %s38
    %p49 = scmp.eq.s32.totalorder %s15, 0
    %p50 = por %p48, %p49
    %p51 = scmp.ne.s32.totalorder %s37, %s38
    %p52 = scmp.eq.s32.totalorder %s16, 1
    %p53 = por %p51, %p52
    %p55 = scmp.ne.s32.totalorder %s38, %s54
    %p56 = scmp.eq.s32.totalorder %s16, 0
    %p57 = por %p55, %p56
    %s58 = sadd.s32 %s17, %s18
    %s59 = sadd.s32 %s29, %s25
    %s60 = ssub.s32 %s58, %s59
    %p61 = scmp.eq.s32.totalorder %s60, 0
    %s63 = sadd.s32 %s62, 1
    %s64 = scalar_select %p61, %s62, %s63
    %p67 = pneg %p61
    %p68 = scmp.eq.s32.totalorder %s10, 1
    %p69 = por %p67, %p68
    %p70 = scmp.ne.s32.totalorder %s62, %s65
    %p71 = scmp.eq.s32.totalorder %s10, 0
    %p72 = por %p70, %p71
    %p73 = scmp.ne.s32.totalorder %s62, %s65
    %p74 = scmp.eq.s32.totalorder %s15, 1
    %p75 = por %p73, %p74
    %p76 = scmp.ne.s32.totalorder %s65, %s66
    %p77 = scmp.eq.s32.totalorder %s15, 0
    %p78 = por %p76, %p77
    %p79 = scmp.ne.s32.totalorder %s65, %s66
    %p80 = scmp.eq.s32.totalorder %s16, 1
    %p81 = por %p79, %p80
    %p83 = scmp.ne.s32.totalorder %s66, %s82
    %p84 = scmp.eq.s32.totalorder %s16, 0
    %p85 = por %p83, %p84
    %s86 = ssub.s32 %s17, %s29
    %p87 = scmp.eq.s32.totalorder %s86, 0
    %s89 = sadd.s32 %s88, 1
    %s90 = scalar_select %p87, %s88, %s89
    %p93 = pneg %p87
    %p94 = scmp.eq.s32.totalorder %s10, 1
    %p95 = por %p93, %p94
    %p96 = scmp.ne.s32.totalorder %s88, %s91
    %p97 = scmp.eq.s32.totalorder %s10, 0
    %p98 = por %p96, %p97
    %p99 = scmp.ne.s32.totalorder %s88, %s91
    %p100 = scmp.eq.s32.totalorder %s15, 1
    %p101 = por %p99, %p100
    %p102 = scmp.ne.s32.totalorder %s91, %s92
    %p103 = scmp.eq.s32.totalorder %s15, 0
    %p104 = por %p102, %p103
    %p105 = scmp.ne.s32.totalorder %s91, %s92
    %p106 = scmp.eq.s32.totalorder %s16, 1
    %p107 = por %p105, %p106
    %p109 = scmp.ne.s32.totalorder %s92, %s108
    %p110 = scmp.eq.s32.totalorder %s16, 0
    %p111 = por %p109, %p110
    %p112 = scmp.le.s32.totalorder 1, %s10
    %p113 = scmp.lt.s32.totalorder %s10, 3
    %p114 = pnand %p112, %p113
    %p115 = pneg %p114
    // Predicated region
    $region9: #{_fftx255_loss_impl.1} parent=5 // pred_check
      _
    $region10: #{_fftx255_loss_impl.1} parent=5 // pred_check_branch
      %117 = sbr.rel (%p114) target = $region12
    $region11: #{_fftx255_loss_impl.1} parent=5 // pred_region
      %s118 = ssub.s32 %s10, 1
    $region12: #{_fftx255_loss_impl.1} parent=5 // pred_fallthru
      _
    %p119 = scmp.lt.s32.totalorder %s10, 2
    // Predicated region
    $region13: #{_fftx255_loss_impl.1} parent=5 // pred_check
      %p120 = pneg %p119
    $region14: #{_fftx255_loss_impl.1} parent=5 // pred_check_branch
      %122 = sbr.rel (%p120) target = $region16
    $region15: #{_fftx255_loss_impl.1} parent=5 // pred_region
      // Predicated region
      $region17: #{_fftx255_loss_impl.1} parent=15 // pred_check
        %p123 = pneg %p44
      $region18: #{_fftx255_loss_impl.1} parent=15 // pred_check_branch
        %125 = sbr.rel (%p123) target = $region20
      $region19: #{_fftx255_loss_impl.1} parent=15 // pred_region
        %s126 = sadd.s32 %s17, %s18
        %s127 = smul.u32 2, %s126
        %p128 = scmp.lt.s32.totalorder %s127, 3
        %s129 = scalar_select %p128, %s127, 3
        %s130 = smul.addr %s129, 8
        %s131 = scalar_lea.vmem %s1, %s130
        %s132 = sadd.s32 %s17, %s18
        %s133 = smul.u32 2, %s132
      $region20: #{_fftx255_loss_impl.1} parent=15 // pred_fallthru
        _
      // Predicated region
      $region21: #{_fftx255_loss_impl.1} parent=15 // pred_check
        %p134 = pneg %p72
      $region22: #{_fftx255_loss_impl.1} parent=15 // pred_check_branch
        %136 = sbr.rel (%p134) target = $region24
      $region23: #{_fftx255_loss_impl.1} parent=15 // pred_region
        %s137 = sadd.s32 %s17, %s18
        %s138 = smul.u32 2, %s137
        %p139 = scmp.lt.s32.totalorder %s138, 3
        %s140 = scalar_select %p139, %s138, 3
        %s141 = smul.addr %s140, 8
        %s142 = scalar_lea.vmem %s2, %s141
        %s143 = sadd.s32 %s17, %s18
        %s144 = smul.u32 2, %s143
      $region24: #{_fftx255_loss_impl.1} parent=15 // pred_fallthru
        _
    $region16: #{_fftx255_loss_impl.1} parent=5 // pred_fallthru
      _
    %p145 = scmp.le.s32.totalorder 1, %s10
    %p146 = scmp.lt.s32.totalorder %s10, 3
    %p147 = pnand %p145, %p146
    %p148 = pneg %p147
    // Predicated region
    $region25: #{_fftx255_loss_impl.1} parent=5 // pred_check
      _
    $region26: #{_fftx255_loss_impl.1} parent=5 // pred_check_branch
      %150 = sbr.rel (%p147) target = $region28
    $region27: #{_fftx255_loss_impl.1} parent=5 // pred_region
      %s151 = ssub.s32 %s10, 1
      %s152 = sadd.s32 %s19, %s20
      %s153 = smul.u32 2, %s152
      %p154 = scmp.lt.s32.totalorder %s153, 3
      %s155 = scalar_select %p154, %s153, 3
      %s156 = smul.addr %s155, 8
      %s157 = scalar_lea.vmem %s1, %s156
      %p158 = pneg %p50
      %p159 = pneg %p47
      %s160 = sadd.s32 %s19, %s20
      %s161 = smul.u32 2, %s160
      %p162 = scmp.lt.s32.totalorder %s161, 3
      %s163 = scalar_select %p162, %s161, 3
      %s164 = smul.addr %s163, 8
      %s165 = scalar_lea.vmem %s2, %s164
      %p166 = pneg %p78
      %p167 = pneg %p75
      %p168 = pneg %p104
      %p169 = pneg %p101
      %p170 = scmp.lt.s32.totalorder %s19, 1
      %s171 = scalar_select %p170, %s19, 1
      %s172 = smul.addr %s171, 8
      %s173 = scalar_lea.vmem %s3, %s172
      %s174 = sadd.s32 %s19, %s20
      %s175 = smul.u32 2, %s174
      %p176 = scmp.lt.s32.totalorder %s175, 3
      %s177 = scalar_select %p176, %s175, 3
      %s178 = smul.addr %s177, 8
      %s179 = scalar_lea.vmem %s1, %s178
      %s180 = sadd.s32 %s19, %s20
      %s181 = smul.u32 2, %s180
      %s182 = sadd.s32 %s19, %s20
      %s183 = smul.u32 2, %s182
      %p184 = scmp.lt.s32.totalorder %s183, 3
      %s185 = scalar_select %p184, %s183, 3
      %s186 = smul.addr %s185, 8
      %s187 = scalar_lea.vmem %s2, %s186
      %s188 = sadd.s32 %s19, %s20
      %s189 = smul.u32 2, %s188
      %p190 = scmp.lt.s32.totalorder %s19, 1
      %s191 = scalar_select %p190, %s19, 1
      %s192 = smul.addr %s191, 8
      %s193 = scalar_lea.vmem %s3, %s192
      %p194 = scmp.eq.s32.totalorder %s20, 0
      // Predicated region
      $region29: #{_fftx255_loss_impl.1} parent=27 // pred_check
        %p195 = pneg %p194
      $region30: #{_fftx255_loss_impl.1} parent=27 // pred_check_branch
        %197 = sbr.rel (%p195) target = $region32
      $region31: #{_fftx255_loss_impl.1} parent=27 // pred_region
        %198 = vst [vmem:[%s193] sm:$0xff] 0.0
      $region32: #{_fftx255_loss_impl.1} parent=27 // pred_fallthru
        _
      %v199 = vld [vmem:[%s179] sm:$0xff]
      %v200 = vld [vmem:[%s179 + $0x8] sm:$0xff]
      %v201 = vld [vmem:[%s187] sm:$0xff]
      %v202 = vld [vmem:[%s187 + $0x8] sm:$0xff]
      %v203 = vsub.f32 %v199, %v201
      %v204 = vsub.f32 %v200, %v202
      %v205 = vld [vmem:[%s193] sm:$0xff]
      %v206 = vmul.f32 %v203, %v203
      %v207 = vmul.f32 %v204, %v204
      %v208 = vadd.f32 %v206, %v207
      %v209 = vadd.f32 %v205, %v208
      %210 = vst [vmem:[%s193] sm:$0xff] %v209
      // Predicated region
      $region33: #{_fftx255_loss_impl.1} parent=27 // pred_check
        %p211 = pneg %p194
      $region34: #{_fftx255_loss_impl.1} parent=27 // pred_check_branch
        %213 = sbr.rel (%p211) target = $region36
      $region35: #{_fftx255_loss_impl.1} parent=27 // pred_region
        %v214 = vld [vmem:[%s193] sm:$0xff]
        %s215 = sld [smem:[#allocation3]]
        %s216 = smul.f32 %s215, 56.445313
        %v217 = vstv %s216
        %v218 = vmul.f32 %v214, %v217
        %219 = vst [vmem:[%s193] sm:$0xff] %v218
      $region36: #{_fftx255_loss_impl.1} parent=27 // pred_fallthru
        _
      %p220 = scmp.lt.s32.totalorder %s19, 1
      %s221 = scalar_select %p220, %s19, 1
      %s222 = smul.addr %s221, 8
      %s223 = scalar_lea.vmem %s3, %s222
      // Predicated region
      $region37: #{_fftx255_loss_impl.1} parent=27 // pred_check
        %p224 = pneg %p101
      $region38: #{_fftx255_loss_impl.1} parent=27 // pred_check_branch
        %226 = sbr.rel (%p224) target = $region40
      $region39: #{_fftx255_loss_impl.1} parent=27 // pred_region
        _
      $region40: #{_fftx255_loss_impl.1} parent=27 // pred_fallthru
        _
    $region28: #{_fftx255_loss_impl.1} parent=5 // pred_fallthru
      _
    %p227 = scmp.le.s32.totalorder 2, %s10
    // Predicated region
    $region41: #{_fftx255_loss_impl.1} parent=5 // pred_check
      %p228 = pneg %p227
    $region42: #{_fftx255_loss_impl.1} parent=5 // pred_check_branch
      %230 = sbr.rel (%p228) target = $region44
    $region43: #{_fftx255_loss_impl.1} parent=5 // pred_region
      %s231 = ssub.s32 %s10, 2
      // Predicated region
      $region45: #{_fftx255_loss_impl.1} parent=43 // pred_check
        %p232 = pneg %p107
      $region46: #{_fftx255_loss_impl.1} parent=43 // pred_check_branch
        %234 = sbr.rel (%p232) target = $region48
      $region47: #{_fftx255_loss_impl.1} parent=43 // pred_region
        %p235 = scmp.lt.s32.totalorder %s21, 1
        %s236 = scalar_select %p235, %s21, 1
        %s237 = smul.addr %s236, 8
        %s238 = scalar_lea.vmem %s3, %s237
      $region48: #{_fftx255_loss_impl.1} parent=43 // pred_fallthru
        _
    $region44: #{_fftx255_loss_impl.1} parent=5 // pred_fallthru
      _
  $region6: #{_fftx255_loss_impl.1} parent=0 // loop_footer
    %s14 = sadd.s32 1, %s10
  $region7: #{_fftx255_loss_impl.1} parent=0 // loop_footer_branch
    %9 = sbr.rel target = $region3
  $region8: #{_fftx255_loss_impl.1} parent=0 // loop_exit
    _

</llo_original>
